<compile_context>
chip_gen: v5e
topology: v5e:2x2
jax: 0.10.0
libtpu: 0.0.40
codegen_flags: <defaults>
</compile_context>

<pallas_src>
import functools

import jax
import jax.numpy as jnp
from jax.experimental import pallas as pl
from jax.experimental.pallas import tpu as pltpu


def _round_up(x, m):
    return (x + m - 1) // m * m


def _feature_att_kernel(feat_ref, cv_ref, w1_ref, shift_ref, w2_ref, b2_ref, out_ref):
    # feat tile: [Cf, T]  (channels on sublanes, spatial positions on lanes)
    feat = feat_ref[0].astype(jnp.float32)

    # first 1x1 conv; eval-mode BN *scale* is pre-folded into w1, only shift left
    z = jnp.dot(w1_ref[...], feat, preferred_element_type=jnp.float32)        # [Ch, T]
    z = z + shift_ref[...]                                                    # [Ch, 1] bcast

    # LeakyReLU (PyTorch default negative_slope = 0.01)
    z = jnp.where(z > 0, z, 0.01 * z)

    # second 1x1 conv (with bias)
    att = jnp.dot(w2_ref[...], z, preferred_element_type=jnp.float32) + b2_ref[...]  # [Ccv, T]

    # sigmoid gate, multiply in cv's native dtype, broadcast over D (sublane axis)
    att = jax.nn.sigmoid(att).astype(cv_ref.dtype)
    out_ref[...] = (att[None, :, None, :] * cv_ref[...]).astype(out_ref.dtype)


@functools.partial(jax.jit, static_argnames=("tile_hw", "donate_cv"))
def feature_att(cv, feat, params, *, tile_hw=2048, donate_cv=False):
    """cv: [B, Ccv, D, H, W] (NCDHW), feat: [B, Cf, H, W] (NCHW)."""
    w1, gamma, beta, rmean, rvar, w2, b2 = (
        params["w1"], params["gamma"], params["beta"], params["rmean"],
        params["rvar"], params["w2"], params["b2"])

    B, Ccv, D, H, W = cv.shape
    Cf = feat.shape[1]
    Ch = w1.shape[1]
    HW = H * W

    # ---- free (transpose-less) channels-first reshape ----
    feat_r = feat.reshape(B, Cf, HW)              # [B, Cf, HW]
    cv_r = cv.reshape(B, Ccv, D, HW)              # [B, Ccv, D, HW]

    # ---- fold eval-mode BN into the first 1x1 conv ----
    eps = jnp.float32(1e-5)
    scale = gamma / jnp.sqrt(rvar + eps)                              # [Ch]
    w1_t = (w1.T * scale[:, None]).astype(jnp.float32)                # [Ch, Cf]
    shift = (beta - rmean * scale).reshape(Ch, 1).astype(jnp.float32)  # [Ch, 1]
    w2_t = w2.T.astype(jnp.float32)                                   # [Ccv, Ch]
    b2_c = b2.reshape(Ccv, 1).astype(jnp.float32)                     # [Ccv, 1]

    cv_bytes = cv.dtype.itemsize
    feat_bytes = feat.dtype.itemsize

    def vmem_need(t):
        cv_blk = Ccv * D * t * cv_bytes
        feat_blk = Cf * t * feat_bytes
        inter = t * (Cf + Ch + Ccv) * 4           # f32 intermediates
        # double-buffered cv-in / out / feat blocks + intermediates + margin
        return 2 * (2 * cv_blk + feat_blk) + inter + (1 << 20)

    vmem_budget = 48 * 1024 * 1024                # safe on v5e/v6e (128 MiB) and v7x (64 MiB)

    # ---- pick the spatial tile: lane-dense (multiple of 128) and as large as fits ----
    if HW <= tile_hw and vmem_need(HW) <= vmem_budget:
        T = HW                                     # full-extent last dim: always legal
        HW_pad = HW
    else:
        HW_pad = _round_up(HW, 128)
        n_lanes = HW_pad // 128
        T = 128
        for d in range(1, n_lanes + 1):            # largest divisor tile that fits
            if n_lanes % d == 0:
                t = 128 * d
                if t <= max(tile_hw, 128) and vmem_need(t) <= vmem_budget:
                    T = t

    if HW_pad != HW:
        pad = HW_pad - HW
        feat_r = jnp.pad(feat_r, ((0, 0), (0, 0), (0, pad)))
        cv_r = jnp.pad(cv_r, ((0, 0), (0, 0), (0, 0), (0, pad)))

    grid = (B, HW_pad // T)

    # advisory cost for the XLA scheduler (memory-bound op)
    flops = 2 * B * HW * (Cf * Ch + Ch * Ccv) + B * HW * Ccv * D
    transcendentals = B * HW * Ccv
    bytes_accessed = 2 * B * Ccv * D * HW * cv_bytes + B * Cf * HW * feat_bytes

    out_r = pl.pallas_call(
        _feature_att_kernel,
        out_shape=jax.ShapeDtypeStruct((B, Ccv, D, HW_pad), cv.dtype),
        grid_spec=pltpu.PrefetchScalarGridSpec(
            num_scalar_prefetch=0,
            grid=grid,
            in_specs=[
                pl.BlockSpec((1, Cf, T), lambda b, s: (b, 0, s)),         # feat tile
                pl.BlockSpec((1, Ccv, D, T), lambda b, s: (b, 0, 0, s)),  # cv tile
                pl.BlockSpec((Ch, Cf), lambda b, s: (0, 0)),              # w1 (BN-folded), resident
                pl.BlockSpec((Ch, 1), lambda b, s: (0, 0)),               # BN shift
                pl.BlockSpec((Ccv, Ch), lambda b, s: (0, 0)),             # w2
                pl.BlockSpec((Ccv, 1), lambda b, s: (0, 0)),              # b2
            ],
            out_specs=pl.BlockSpec((1, Ccv, D, T), lambda b, s: (b, 0, 0, s)),
        ),
        compiler_params=pltpu.CompilerParams(
            dimension_semantics=("parallel", "parallel"),
            vmem_limit_bytes=int(min(max(vmem_need(T) + (4 << 20), 32 << 20), 56 << 20)),
        ),
        cost_estimate=pl.CostEstimate(
            flops=int(flops),
            transcendentals=int(transcendentals),
            bytes_accessed=int(bytes_accessed)),
        input_output_aliases=({1: 0} if donate_cv else {}),
    )(feat_r, cv_r, w1_t, shift, w2_t, b2_c)

    # ---- back to NCDHW (pure slice + reshape, no transpose) ----
    out = out_r[..., :HW].reshape(B, Ccv, D, H, W)
    return out


def _reference(cv, feat, params):
    """Pure-JAX reference mirroring the PyTorch forward (eval-mode BN)."""
    w1, gamma, beta, rmean, rvar, w2, b2 = (
        params["w1"], params["gamma"], params["beta"], params["rmean"],
        params["rvar"], params["w2"], params["b2"])
    x = jnp.transpose(feat, (0, 2, 3, 1))                     # [B,H,W,Cf]
    z = jnp.einsum("bhwc,cd->bhwd", x, w1)
    z = (z - rmean) / jnp.sqrt(rvar + 1e-5) * gamma + beta
    z = jnp.where(z > 0, z, 0.01 * z)
    att = jnp.einsum("bhwd,de->bhwe", z, w2) + b2             # [B,H,W,Ccv]
    att = jax.nn.sigmoid(att)
    att = jnp.transpose(att, (0, 3, 1, 2))[:, :, None, :, :]  # [B,Ccv,1,H,W]
    return att * cv


if __name__ == "__main__":
    # Small shapes: batch=2, feat_chan=16, cv_chan=8, disparities D=4, 16x16 spatial.
    B, Cf, Ccv, D, H, W = 2, 16, 8, 4, 16, 16
    Ch = Cf // 2

    key = jax.random.PRNGKey(0)
    k = jax.random.split(key, 8)
    cv = jax.random.normal(k[0], (B, Ccv, D, H, W), dtype=jnp.float32)
    feat = jax.random.normal(k[1], (B, Cf, H, W), dtype=jnp.float32)

    # Deterministic synthetic parameters (channels-last matmul form, as in PyTorch 1x1 convs).
    # TODO(synk): training-mode BatchNorm (running-stat updates) is not modeled; eval-mode BN
    # is folded into the first conv, matching module.eval() semantics.
    params = {
        "w1": 0.1 * jax.random.normal(k[2], (Cf, Ch), dtype=jnp.float32),
        "gamma": 1.0 + 0.05 * jax.random.normal(k[3], (Ch,), dtype=jnp.float32),
        "beta": 0.05 * jax.random.normal(k[4], (Ch,), dtype=jnp.float32),
        "rmean": 0.05 * jax.random.normal(k[5], (Ch,), dtype=jnp.float32),
        "rvar": jnp.abs(1.0 + 0.05 * jax.random.normal(k[6], (Ch,), dtype=jnp.float32)),
        "w2": 0.1 * jax.random.normal(k[7], (Ch, Ccv), dtype=jnp.float32),
        "b2": jnp.linspace(-0.1, 0.1, Ccv, dtype=jnp.float32),
    }

    out = feature_att(cv, feat, params)
    out = jax.block_until_ready(out)

    ref = _reference(cv, feat, params)
    assert out.shape == (B, Ccv, D, H, W)
    assert jnp.allclose(out, ref, atol=1e-5, rtol=1e-5), "mismatch vs reference"

    print("KERNEL_OK")
</pallas_src>

<mosaic_0001>
module attributes {stable_mosaic.version = 11 : i64} {
  func.func @_feature_att_kernel(%arg0: i32, %arg1: i32, %arg2: memref<1x16x256xf32, #tpu.memory_space<vmem>>, %arg3: memref<1x8x4x256xf32, #tpu.memory_space<vmem>>, %arg4: memref<8x16xf32, #tpu.memory_space<vmem>>, %arg5: memref<8x1xf32, #tpu.memory_space<vmem>>, %arg6: memref<8x8xf32, #tpu.memory_space<vmem>>, %arg7: memref<8x1xf32, #tpu.memory_space<vmem>>, %arg8: memref<1x8x4x256xf32, #tpu.memory_space<vmem>>) attributes {dimension_semantics = [#tpu.dimension_semantics<parallel>, #tpu.dimension_semantics<parallel>], iteration_bounds = array<i64: 2, 1>, scalar_prefetch = 0 : i64, scratch_operands = 0 : i64, tpu.core_type = #tpu.core_type<tc>, window_params = [{transform_indices = @transform_0, window_bounds = array<i64: 1, 16, 256>}, {transform_indices = @transform_1, window_bounds = array<i64: 1, 8, 4, 256>}, {pipeline_mode = #tpu.pipeline_mode<synchronous>, transform_indices = @transform_2, window_bounds = array<i64: 8, 16>}, {pipeline_mode = #tpu.pipeline_mode<synchronous>, transform_indices = @transform_3, window_bounds = array<i64: 8, 1>}, {pipeline_mode = #tpu.pipeline_mode<synchronous>, transform_indices = @transform_4, window_bounds = array<i64: 8, 8>}, {pipeline_mode = #tpu.pipeline_mode<synchronous>, transform_indices = @transform_5, window_bounds = array<i64: 8, 1>}, {transform_indices = @transform_6, window_bounds = array<i64: 1, 8, 4, 256>}]} {
    %c0 = arith.constant 0 : index
    %c0_0 = arith.constant 0 : index
    %c0_1 = arith.constant 0 : index
    %0 = vector.load %arg2[%c0, %c0_0, %c0_1] : memref<1x16x256xf32, #tpu.memory_space<vmem>>, vector<1x16x256xf32>
    %1 = vector.shape_cast %0 : vector<1x16x256xf32> to vector<16x256xf32>
    %c0_2 = arith.constant 0 : index
    %c0_3 = arith.constant 0 : index
    %2 = vector.load %arg4[%c0_2, %c0_3] : memref<8x16xf32, #tpu.memory_space<vmem>>, vector<8x16xf32>
    %cst = arith.constant dense<0.000000e+00> : vector<8x256xf32>
    %3 = tpu.matmul %2, %1, %cst {dimension_numbers = #tpu.dot_dimension_numbers<[1], [0], [0], [1], [0, 0, 1, 1], [], []>} : vector<8x16xf32>, vector<16x256xf32>, vector<8x256xf32> -> vector<8x256xf32>
    %c0_4 = arith.constant 0 : index
    %c0_5 = arith.constant 0 : index
    %4 = vector.load %arg5[%c0_4, %c0_5] : memref<8x1xf32, #tpu.memory_space<vmem>>, vector<8x1xf32>
    %5 = vector.broadcast %4 : vector<8x1xf32> to vector<8x256xf32>
    %6 = arith.addf %3, %5 : vector<8x256xf32>
    %cst_6 = arith.constant 0.000000e+00 : f32
    %7 = vector.broadcast %cst_6 : f32 to vector<8x256xf32>
    %8 = arith.cmpf ogt, %6, %7 : vector<8x256xf32>
    %cst_7 = arith.constant 0.00999999977 : f32
    %9 = vector.broadcast %cst_7 : f32 to vector<8x256xf32>
    %10 = arith.mulf %9, %6 : vector<8x256xf32>
    %11 = arith.select %8, %6, %10 : vector<8x256xi1>, vector<8x256xf32>
    %c0_8 = arith.constant 0 : index
    %c0_9 = arith.constant 0 : index
    %12 = vector.load %arg6[%c0_8, %c0_9] : memref<8x8xf32, #tpu.memory_space<vmem>>, vector<8x8xf32>
    %cst_10 = arith.constant dense<0.000000e+00> : vector<8x256xf32>
    %13 = tpu.matmul %12, %11, %cst_10 {dimension_numbers = #tpu.dot_dimension_numbers<[1], [0], [0], [1], [0, 0, 1, 1], [], []>} : vector<8x8xf32>, vector<8x256xf32>, vector<8x256xf32> -> vector<8x256xf32>
    %c0_11 = arith.constant 0 : index
    %c0_12 = arith.constant 0 : index
    %14 = vector.load %arg7[%c0_11, %c0_12] : memref<8x1xf32, #tpu.memory_space<vmem>>, vector<8x1xf32>
    %15 = vector.broadcast %14 : vector<8x1xf32> to vector<8x256xf32>
    %16 = arith.addf %13, %15 : vector<8x256xf32>
    %17 = arith.negf %16 : vector<8x256xf32>
    %18 = math.exp %17 : vector<8x256xf32>
    %cst_13 = arith.constant 1.000000e+00 : f32
    %19 = vector.broadcast %cst_13 : f32 to vector<8x256xf32>
    %20 = arith.addf %19, %18 : vector<8x256xf32>
    %21 = arith.divf %19, %20 : vector<8x256xf32>
    %22 = vector.shape_cast %21 : vector<8x256xf32> to vector<1x8x1x256xf32>
    %c0_14 = arith.constant 0 : index
    %c0_15 = arith.constant 0 : index
    %c0_16 = arith.constant 0 : index
    %c0_17 = arith.constant 0 : index
    %23 = vector.load %arg3[%c0_14, %c0_15, %c0_16, %c0_17] : memref<1x8x4x256xf32, #tpu.memory_space<vmem>>, vector<1x8x4x256xf32>
    %24 = vector.broadcast %22 : vector<1x8x1x256xf32> to vector<1x8x4x256xf32>
    %25 = arith.mulf %24, %23 : vector<1x8x4x256xf32>
    %c0_18 = arith.constant 0 : index
    %c0_19 = arith.constant 0 : index
    %c0_20 = arith.constant 0 : index
    %c0_21 = arith.constant 0 : index
    %26 = vector.load %arg8[%c0_18, %c0_19, %c0_20, %c0_21] : memref<1x8x4x256xf32, #tpu.memory_space<vmem>>, vector<1x8x4x256xf32>
    tpu.vector_store %arg8[%c0_18, %c0_19, %c0_20, %c0_21], %25 {strides = array<i32>} : memref<1x8x4x256xf32, #tpu.memory_space<vmem>>, vector<1x8x4x256xf32>,
    return
  }
  func.func @transform_0(%arg0: i32, %arg1: i32) -> (i32, i32, i32) {
    %c0_i32 = arith.constant 0 : i32
    %c0_i32_0 = arith.constant 0 : i32
    return %arg0, %c0_i32, %arg1 : i32, i32, i32
  }
  func.func @transform_1(%arg0: i32, %arg1: i32) -> (i32, i32, i32, i32) {
    %c0_i32 = arith.constant 0 : i32
    %c0_i32_0 = arith.constant 0 : i32
    %c0_i32_1 = arith.constant 0 : i32
    return %arg0, %c0_i32, %c0_i32_0, %arg1 : i32, i32, i32, i32
  }
  func.func @transform_2(%arg0: i32, %arg1: i32) -> (i32, i32) {
    %c0_i32 = arith.constant 0 : i32
    %c0_i32_0 = arith.constant 0 : i32
    %c0_i32_1 = arith.constant 0 : i32
    return %c0_i32, %c0_i32_0 : i32, i32
  }
  func.func @transform_3(%arg0: i32, %arg1: i32) -> (i32, i32) {
    %c0_i32 = arith.constant 0 : i32
    %c0_i32_0 = arith.constant 0 : i32
    %c0_i32_1 = arith.constant 0 : i32
    return %c0_i32, %c0_i32_0 : i32, i32
  }
  func.func @transform_4(%arg0: i32, %arg1: i32) -> (i32, i32) {
    %c0_i32 = arith.constant 0 : i32
    %c0_i32_0 = arith.constant 0 : i32
    %c0_i32_1 = arith.constant 0 : i32
    return %c0_i32, %c0_i32_0 : i32, i32
  }
  func.func @transform_5(%arg0: i32, %arg1: i32) -> (i32, i32) {
    %c0_i32 = arith.constant 0 : i32
    %c0_i32_0 = arith.constant 0 : i32
    %c0_i32_1 = arith.constant 0 : i32
    return %c0_i32, %c0_i32_0 : i32, i32
  }
  func.func @transform_6(%arg0: i32, %arg1: i32) -> (i32, i32, i32, i32) {
    %c0_i32 = arith.constant 0 : i32
    %c0_i32_0 = arith.constant 0 : i32
    %c0_i32_1 = arith.constant 0 : i32
    return %arg0, %c0_i32, %c0_i32_0, %arg1 : i32, i32, i32, i32
  }
}

</mosaic_0001>

<llo_original>
// kernel: feature_att.1
$region0: #{feature_att.1}
  #allocation0 [shape = 'u32[]', space=smem, size = 0x4, offset = 0x4, fixed_abs, tag = 'smem constant byte address 0x4 - core index']
  #allocation1 [shape = 'u32[72,128]{1,0:T(1,128)}', space=vmem, size = 0x9000, scoped, tag = 'internal scratch']
  %s0 = inlined_call_operand.vmem [shape: f32[2,16,256], index: 0, kind: input, shape index: {}]
  %s1 = inlined_call_operand.vmem [shape: f32[2,8,4,256], index: 1, kind: input, shape index: {}]
  %s2 = inlined_call_operand.vmem [shape: f32[8,16], index: 2, kind: input, shape index: {}]
  %s3 = inlined_call_operand.vmem [shape: f32[8,1], index: 3, kind: input, shape index: {}]
  %s4 = inlined_call_operand.vmem [shape: f32[8,8], index: 4, kind: input, shape index: {}]
  %s5 = inlined_call_operand.vmem [shape: f32[8,1], index: 5, kind: input, shape index: {}]
  %s6 = inlined_call_operand.vmem [shape: f32[2,8,4,256], index: 6, kind: output, shape index: {}]
  %s7 = sld [smem:[#allocation0]]
  $region57: #{feature_att.1} parent=0
    _
  %s9 = ssub.s32 1, %s7
  %s10 = scalar_select 0, %s9, %s7
  loop: start=0, step=1, limit=4
  $region2: #{feature_att.1} parent=0 // loop_pre_header
    _
  $region3: #{feature_att.1} parent=0 // loop_header
    %s12 = sphi 0, %s16
    %p13 = scmp.ge.s32.totalorder %s12, 4
    %s19 = sphi 0, %s31
    %s20 = sphi 0, %s27
    %s21 = sphi 0, %s19
    %s22 = sphi 0, %s20
    %s23 = sphi 0, %s21
    %s24 = sphi 0, %s22
    %s36 = sphi 0, %s38
    %s39 = sphi 0, %s36
    %s40 = sphi 0, %s39
    %s56 = sphi 0, %s40
    %s64 = sphi 0, %s66
    %s67 = sphi 0, %s64
    %s68 = sphi 0, %s67
    %s84 = sphi 0, %s68
    %s88 = sphi 0, %s88
    %s90 = sphi 0, %s88
    %s91 = sphi 0, %s90
    %s105 = sphi 0, %s91
    %s109 = sphi 0, %s109
    %s111 = sphi 0, %s109
    %s112 = sphi 0, %s111
    %s126 = sphi 0, %s112
    %s130 = sphi 0, %s130
    %s132 = sphi 0, %s130
    %s133 = sphi 0, %s132
    %s147 = sphi 0, %s133
    %s151 = sphi 0, %s151
    %s153 = sphi 0, %s151
    %s154 = sphi 0, %s153
    %s168 = sphi 0, %s154
    %s176 = sphi 0, %s178
    %s179 = sphi 0, %s176
    %s180 = sphi 0, %s179
    %s196 = sphi 0, %s180
  $region4: #{feature_att.1} parent=0 // loop_header_branch
    %15 = sbr.rel (%p13) target = $region8
  $region5: #{feature_att.1} parent=0 // loop_body
    %s17 = ssub.s32 %s12, 1
    %s18 = ssub.s32 %s12, 2
    %s25 = sadd.s32 1, %s20
    %p26 = scmp.ge.s32.totalorder %s25, 1
    %s27 = scalar_select %p26, 0, %s25
    %s28 = sadd.s32 1, %s19
    %s29 = scalar_select %p26, %s28, %s19
    %p30 = scmp.ge.s32.totalorder %s29, 2
    %s31 = scalar_select %p30, 0, %s29
    %s32 = ssub.s32 %s19, %s31
    %s33 = ssub.s32 %s20, %s27
    %s34 = sor.u32 %s32, %s33
    %p35 = scmp.eq.s32.totalorder %s34, 0
    %s37 = sadd.s32 %s36, 1
    %s38 = scalar_select %p35, %s36, %s37
    %p41 = pneg %p35
    %p42 = scmp.eq.s32.totalorder %s12, 1
    %p43 = por %p41, %p42
    %p44 = scmp.ne.s32.totalorder %s36, %s39
    %p45 = scmp.eq.s32.totalorder %s12, 0
    %p46 = por %p44, %p45
    %p47 = scmp.ne.s32.totalorder %s36, %s39
    %p48 = scmp.eq.s32.totalorder %s17, 1
    %p49 = por %p47, %p48
    %p50 = scmp.ne.s32.totalorder %s39, %s40
    %p51 = scmp.eq.s32.totalorder %s17, 0
    %p52 = por %p50, %p51
    %p53 = scmp.ne.s32.totalorder %s39, %s40
    %p54 = scmp.eq.s32.totalorder %s18, 1
    %p55 = por %p53, %p54
    %p57 = scmp.ne.s32.totalorder %s40, %s56
    %p58 = scmp.eq.s32.totalorder %s18, 0
    %p59 = por %p57, %p58
    %s60 = ssub.s32 %s19, %s31
    %s61 = ssub.s32 %s20, %s27
    %s62 = sor.u32 %s60, %s61
    %p63 = scmp.eq.s32.totalorder %s62, 0
    %s65 = sadd.s32 %s64, 1
    %s66 = scalar_select %p63, %s64, %s65
    %p69 = pneg %p63
    %p70 = scmp.eq.s32.totalorder %s12, 1
    %p71 = por %p69, %p70
    %p72 = scmp.ne.s32.totalorder %s64, %s67
    %p73 = scmp.eq.s32.totalorder %s12, 0
    %p74 = por %p72, %p73
    %p75 = scmp.ne.s32.totalorder %s64, %s67
    %p76 = scmp.eq.s32.totalorder %s17, 1
    %p77 = por %p75, %p76
    %p78 = scmp.ne.s32.totalorder %s67, %s68
    %p79 = scmp.eq.s32.totalorder %s17, 0
    %p80 = por %p78, %p79
    %p81 = scmp.ne.s32.totalorder %s67, %s68
    %p82 = scmp.eq.s32.totalorder %s18, 1
    %p83 = por %p81, %p82
    %p85 = scmp.ne.s32.totalorder %s68, %s84
    %p86 = scmp.eq.s32.totalorder %s18, 0
    %p87 = por %p85, %p86
    %s89 = sadd.s32 %s88, 1
    %p92 = scmp.eq.s32.totalorder %s12, 1
    %p93 = scmp.ne.s32.totalorder %s88, %s90
    %p94 = scmp.eq.s32.totalorder %s12, 0
    %p95 = por %p93, %p94
    %p96 = scmp.ne.s32.totalorder %s88, %s90
    %p97 = scmp.eq.s32.totalorder %s17, 1
    %p98 = por %p96, %p97
    %p99 = scmp.ne.s32.totalorder %s90, %s91
    %p100 = scmp.eq.s32.totalorder %s17, 0
    %p101 = por %p99, %p100
    %p102 = scmp.ne.s32.totalorder %s90, %s91
    %p103 = scmp.eq.s32.totalorder %s18, 1
    %p104 = por %p102, %p103
    %p106 = scmp.ne.s32.totalorder %s91, %s105
    %p107 = scmp.eq.s32.totalorder %s18, 0
    %p108 = por %p106, %p107
    %s110 = sadd.s32 %s109, 1
    %p113 = scmp.eq.s32.totalorder %s12, 1
    %p114 = scmp.ne.s32.totalorder %s109, %s111
    %p115 = scmp.eq.s32.totalorder %s12, 0
    %p116 = por %p114, %p115
    %p117 = scmp.ne.s32.totalorder %s109, %s111
    %p118 = scmp.eq.s32.totalorder %s17, 1
    %p119 = por %p117, %p118
    %p120 = scmp.ne.s32.totalorder %s111, %s112
    %p121 = scmp.eq.s32.totalorder %s17, 0
    %p122 = por %p120, %p121
    %p123 = scmp.ne.s32.totalorder %s111, %s112
    %p124 = scmp.eq.s32.totalorder %s18, 1
    %p125 = por %p123, %p124
    %p127 = scmp.ne.s32.totalorder %s112, %s126
    %p128 = scmp.eq.s32.totalorder %s18, 0
    %p129 = por %p127, %p128
    %s131 = sadd.s32 %s130, 1
    %p134 = scmp.eq.s32.totalorder %s12, 1
    %p135 = scmp.ne.s32.totalorder %s130, %s132
    %p136 = scmp.eq.s32.totalorder %s12, 0
    %p137 = por %p135, %p136
    %p138 = scmp.ne.s32.totalorder %s130, %s132
    %p139 = scmp.eq.s32.totalorder %s17, 1
    %p140 = por %p138, %p139
    %p141 = scmp.ne.s32.totalorder %s132, %s133
    %p142 = scmp.eq.s32.totalorder %s17, 0
    %p143 = por %p141, %p142
    %p144 = scmp.ne.s32.totalorder %s132, %s133
    %p145 = scmp.eq.s32.totalorder %s18, 1
    %p146 = por %p144, %p145
    %p148 = scmp.ne.s32.totalorder %s133, %s147
    %p149 = scmp.eq.s32.totalorder %s18, 0
    %p150 = por %p148, %p149
    %s152 = sadd.s32 %s151, 1
    %p155 = scmp.eq.s32.totalorder %s12, 1
    %p156 = scmp.ne.s32.totalorder %s151, %s153
    %p157 = scmp.eq.s32.totalorder %s12, 0
    %p158 = por %p156, %p157
    %p159 = scmp.ne.s32.totalorder %s151, %s153
    %p160 = scmp.eq.s32.totalorder %s17, 1
    %p161 = por %p159, %p160
    %p162 = scmp.ne.s32.totalorder %s153, %s154
    %p163 = scmp.eq.s32.totalorder %s17, 0
    %p164 = por %p162, %p163
    %p165 = scmp.ne.s32.totalorder %s153, %s154
    %p166 = scmp.eq.s32.totalorder %s18, 1
    %p167 = por %p165, %p166
    %p169 = scmp.ne.s32.totalorder %s154, %s168
    %p170 = scmp.eq.s32.totalorder %s18, 0
    %p171 = por %p169, %p170
    %s172 = ssub.s32 %s19, %s31
    %s173 = ssub.s32 %s20, %s27
    %s174 = sor.u32 %s172, %s173
    %p175 = scmp.eq.s32.totalorder %s174, 0
    %s177 = sadd.s32 %s176, 1
    %s178 = scalar_select %p175, %s176, %s177
    %p181 = pneg %p175
    %p182 = scmp.eq.s32.totalorder %s12, 1
    %p183 = por %p181, %p182
    %p184 = scmp.ne.s32.totalorder %s176, %s179
    %p185 = scmp.eq.s32.totalorder %s12, 0
    %p186 = por %p184, %p185
    %p187 = scmp.ne.s32.totalorder %s176, %s179
    %p188 = scmp.eq.s32.totalorder %s17, 1
    %p189 = por %p187, %p188
    %p190 = scmp.ne.s32.totalorder %s179, %s180
    %p191 = scmp.eq.s32.totalorder %s17, 0
    %p192 = por %p190, %p191
    %p193 = scmp.ne.s32.totalorder %s179, %s180
    %p194 = scmp.eq.s32.totalorder %s18, 1
    %p195 = por %p193, %p194
    %p197 = scmp.ne.s32.totalorder %s180, %s196
    %p198 = scmp.eq.s32.totalorder %s18, 0
    %p199 = por %p197, %p198
    %p200 = scmp.le.s32.totalorder 1, %s12
    %p201 = scmp.lt.s32.totalorder %s12, 3
    %p202 = pnand %p200, %p201
    %p203 = pneg %p202
    // Predicated region
    $region9: #{feature_att.1} parent=5 // pred_check
      _
    $region10: #{feature_att.1} parent=5 // pred_check_branch
      %205 = sbr.rel (%p202) target = $region12
    $region11: #{feature_att.1} parent=5 // pred_region
      %s206 = ssub.s32 %s12, 1
      // Predicated region
      $region13: #{feature_att.1} parent=11 // pred_check
        %p207 = pneg %p101
      $region14: #{feature_att.1} parent=11 // pred_check_branch
        %209 = sbr.rel (%p207) target = $region16
      $region15: #{feature_att.1} parent=11 // pred_region
        _
      $region16: #{feature_att.1} parent=11 // pred_fallthru
        _
      // Predicated region
      $region17: #{feature_att.1} parent=11 // pred_check
        %p210 = pneg %p122
      $region18: #{feature_att.1} parent=11 // pred_check_branch
        %212 = sbr.rel (%p210) target = $region20
      $region19: #{feature_att.1} parent=11 // pred_region
        _
      $region20: #{feature_att.1} parent=11 // pred_fallthru
        _
      // Predicated region
      $region21: #{feature_att.1} parent=11 // pred_check
        %p213 = pneg %p143
      $region22: #{feature_att.1} parent=11 // pred_check_branch
        %215 = sbr.rel (%p213) target = $region24
      $region23: #{feature_att.1} parent=11 // pred_region
        _
      $region24: #{feature_att.1} parent=11 // pred_fallthru
        _
      // Predicated region
      $region25: #{feature_att.1} parent=11 // pred_check
        %p216 = pneg %p164
      $region26: #{feature_att.1} parent=11 // pred_check_branch
        %218 = sbr.rel (%p216) target = $region28
      $region27: #{feature_att.1} parent=11 // pred_region
        _
      $region28: #{feature_att.1} parent=11 // pred_fallthru
        _
    $region12: #{feature_att.1} parent=5 // pred_fallthru
      _
    %p219 = scmp.lt.s32.totalorder %s12, 2
    // Predicated region
    $region29: #{feature_att.1} parent=5 // pred_check
      %p220 = pneg %p219
    $region30: #{feature_att.1} parent=5 // pred_check_branch
      %222 = sbr.rel (%p220) target = $region32
    $region31: #{feature_att.1} parent=5 // pred_region
      // Predicated region
      $region33: #{feature_att.1} parent=31 // pred_check
        %p223 = pneg %p46
      $region34: #{feature_att.1} parent=31 // pred_check_branch
        %225 = sbr.rel (%p223) target = $region36
      $region35: #{feature_att.1} parent=31 // pred_region
        %s226 = smul.u32 2, %s20
        %p227 = scmp.lt.s32.totalorder %s19, 1
        %s228 = scalar_select %p227, %s19, 1
        %p229 = scmp.lt.s32.totalorder %s226, 1
        %s230 = scalar_select %p229, %s226, 1
        %s231 = smul.addr %s228, 4
        %s232 = sadd.s32 %s230, %s231
        %s233 = smul.addr %s232, 8
        %s234 = scalar_lea.vmem %s0, %s233
        %s235 = smul.u32 2, %s20
      $region36: #{feature_att.1} parent=31 // pred_fallthru
        _
      // Predicated region
      $region37: #{feature_att.1} parent=31 // pred_check
        %p236 = pneg %p74
      $region38: #{feature_att.1} parent=31 // pred_check_branch
        %238 = sbr.rel (%p236) target = $region40
      $region39: #{feature_att.1} parent=31 // pred_region
        %s239 = smul.u32 2, %s20
        %p240 = scmp.lt.s32.totalorder %s19, 1
        %s241 = scalar_select %p240, %s19, 1
        %p242 = scmp.lt.s32.totalorder %s239, 1
        %s243 = scalar_select %p242, %s239, 1
        %s244 = smul.addr %s241, 16
        %s245 = sadd.s32 %s243, %s244
        %s246 = smul.addr %s245, 4
        %s247 = scalar_lea.vmem %s1, %s246
        %s248 = smul.u32 2, %s20
      $region40: #{feature_att.1} parent=31 // pred_fallthru
        _
    $region32: #{feature_att.1} parent=5 // pred_fallthru
      _
    %p249 = scmp.le.s32.totalorder 1, %s12
    %p250 = scmp.lt.s32.totalorder %s12, 3
    %p251 = pnand %p249, %p250
    %p252 = pneg %p251
    // Predicated region
    $region41: #{feature_att.1} parent=5 // pred_check
      _
    $region42: #{feature_att.1} parent=5 // pred_check_branch
      %254 = sbr.rel (%p251) target = $region44
    $region43: #{feature_att.1} parent=5 // pred_region
      %s255 = ssub.s32 %s12, 1
      %s256 = smul.u32 2, %s22
      %p257 = scmp.lt.s32.totalorder %s21, 1
      %s258 = scalar_select %p257, %s21, 1
      %p259 = scmp.lt.s32.totalorder %s256, 1
      %s260 = scalar_select %p259, %s256, 1
      %s261 = smul.addr %s258, 4
      %s262 = sadd.s32 %s260, %s261
      %s263 = smul.addr %s262, 8
      %s264 = scalar_lea.vmem %s0, %s263
      %p265 = pneg %p52
      %p266 = pneg %p49
      %s267 = smul.u32 2, %s22
      %p268 = scmp.lt.s32.totalorder %s21, 1
      %s269 = scalar_select %p268, %s21, 1
      %p270 = scmp.lt.s32.totalorder %s267, 1
      %s271 = scalar_select %p270, %s267, 1
      %s272 = smul.addr %s269, 16
      %s273 = sadd.s32 %s271, %s272
      %s274 = smul.addr %s273, 4
      %s275 = scalar_lea.vmem %s1, %s274
      %p276 = pneg %p80
      %p277 = pneg %p77
      %p278 = pneg %p101
      %p279 = pneg %p98
      %p280 = pneg %p122
      %p281 = pneg %p119
      %p282 = pneg %p143
      %p283 = pneg %p140
      %p284 = pneg %p164
      %p285 = pneg %p161
      %p286 = pneg %p192
      %p287 = pneg %p189
      %s288 = smul.u32 2, %s22
      %p289 = scmp.lt.s32.totalorder %s21, 1
      %s290 = scalar_select %p289, %s21, 1
      %p291 = scmp.lt.s32.totalorder %s288, 1
      %s292 = scalar_select %p291, %s288, 1
      %s293 = smul.addr %s290, 16
      %s294 = sadd.s32 %s292, %s293
      %s295 = smul.addr %s294, 4
      %s296 = scalar_lea.vmem %s6, %s295
      %s297 = smul.u32 2, %s22
      %p298 = scmp.lt.s32.totalorder %s21, 1
      %s299 = scalar_select %p298, %s21, 1
      %p300 = scmp.lt.s32.totalorder %s297, 1
      %s301 = scalar_select %p300, %s297, 1
      %s302 = smul.addr %s299, 4
      %s303 = sadd.s32 %s301, %s302
      %s304 = smul.addr %s303, 8
      %s305 = scalar_lea.vmem %s0, %s304
      %s306 = smul.u32 2, %s22
      %s307 = smul.u32 2, %s22
      %p308 = scmp.lt.s32.totalorder %s21, 1
      %s309 = scalar_select %p308, %s21, 1
      %p310 = scmp.lt.s32.totalorder %s307, 1
      %s311 = scalar_select %p310, %s307, 1
      %s312 = smul.addr %s309, 16
      %s313 = sadd.s32 %s311, %s312
      %s314 = smul.addr %s313, 4
      %s315 = scalar_lea.vmem %s1, %s314
      %s316 = smul.u32 2, %s22
      %s317 = smul.u32 2, %s22
      %p318 = scmp.lt.s32.totalorder %s21, 1
      %s319 = scalar_select %p318, %s21, 1
      %p320 = scmp.lt.s32.totalorder %s317, 1
      %s321 = scalar_select %p320, %s317, 1
      %s322 = smul.addr %s319, 16
      %s323 = sadd.s32 %s321, %s322
      %s324 = smul.addr %s323, 4
      %s325 = scalar_lea.vmem %s6, %s324
      %s326 = smul.u32 2, %s22
      %v327 = vld [vmem:[%s305] sm:$0xff]
      %v328 = vld [vmem:[%s305 + $0x8] sm:$0xff]
      %v329 = vld [vmem:[%s305 + $0x10] sm:$0xff]
      %v330 = vld [vmem:[%s305 + $0x18] sm:$0xff]
      %v331 = vld [vmem:[%s2] sm:$0xff]
      %v332 = vld [vmem:[%s3] sm:$0xff]
      %334 = vset.pattern.permute.xlu0 0
      %335 = vperm.xlu0 %334, %v332
      %v336 = vpop.permute.xlu0 %335
      %vm338 = vcmask 130048
      %v340 = vsel %vm338, %v331, 0
      %342 = vmatpush.msra.mxu0 0.0
      %343 = vmatpush.msra.mxu0 0.0
      %344 = vmatpush.msra.mxu0 0.0
      %345 = vmatpush.msra.mxu0 0.0
      %346 = vmatpush.msra.mxu0 0.0
      %347 = vmatpush.msra.mxu0 0.0
      %348 = vmatpush.msra.mxu0 0.0
      %349 = vmatpush.msra.mxu0 0.0
      %350 = vmatpush.msra.mxu0 0.0
      %351 = vmatpush.msra.mxu0 0.0
      %352 = vmatpush.msra.mxu0 0.0
      %353 = vmatpush.msra.mxu0 0.0
      %354 = vmatpush.msra.mxu0 0.0
      %355 = vmatpush.msra.mxu0 0.0
      %356 = vmatpush.msra.mxu0 %v329
      %357 = vmatpush.msra.mxu0 %v327
      %358 = vmatmul.f32.gmra.mxu0 %v340
      %v359 = vpop.f32.mrf.mxu0
      %v360 = vadd.f32 %v336, %v359
      %361 = vdwg.mxu0
      %362 = vmatpush.msra.mxu0 0.0
      %363 = vmatpush.msra.mxu0 0.0
      %364 = vmatpush.msra.mxu0 0.0
      %365 = vmatpush.msra.mxu0 0.0
      %366 = vmatpush.msra.mxu0 0.0
      %367 = vmatpush.msra.mxu0 0.0
      %368 = vmatpush.msra.mxu0 0.0
      %369 = vmatpush.msra.mxu0 0.0
      %370 = vmatpush.msra.mxu0 0.0
      %371 = vmatpush.msra.mxu0 0.0
      %372 = vmatpush.msra.mxu0 0.0
      %373 = vmatpush.msra.mxu0 0.0
      %374 = vmatpush.msra.mxu0 0.0
      %375 = vmatpush.msra.mxu0 0.0
      %376 = vmatpush.msra.mxu0 %v330
      %377 = vmatpush.msra.mxu0 %v328
      %378 = vmatmul.f32.gmra.mxu0 %v340
      %v379 = vpop.f32.mrf.mxu0
      %v380 = vadd.f32 %v336, %v379
      %381 = vdwg.mxu0
      %vm382 = vcmp.gt.f32.partialorder %v360, 0.0
      %vm383 = vcmp.gt.f32.partialorder %v380, 0.0
      %v384 = vmul.f32 %v360, 0.01
      %v385 = vmul.f32 %v380, 0.01
      %v386 = vsel %vm382, %v360, %v384
      %v387 = vsel %vm383, %v380, %v385
      %v388 = vld [vmem:[%s4] sm:$0xff]
      %v389 = vld [vmem:[%s5] sm:$0xff]
      %391 = vset.pattern.permute.xlu0 0
      %392 = vperm.xlu0 %391, %v389
      %v393 = vpop.permute.xlu0 %392
      %vm395 = vcmask 64512
      %v397 = vsel %vm395, %v388, 0
      %399 = vmatpush.msra.mxu0 0.0
      %400 = vmatpush.msra.mxu0 0.0
      %401 = vmatpush.msra.mxu0 0.0
      %402 = vmatpush.msra.mxu0 0.0
      %403 = vmatpush.msra.mxu0 0.0
      %404 = vmatpush.msra.mxu0 0.0
      %405 = vmatpush.msra.mxu0 0.0
      %406 = vmatpush.msra.mxu0 0.0
      %407 = vmatpush.msra.mxu0 0.0
      %408 = vmatpush.msra.mxu0 0.0
      %409 = vmatpush.msra.mxu0 0.0
      %410 = vmatpush.msra.mxu0 0.0
      %411 = vmatpush.msra.mxu0 0.0
      %412 = vmatpush.msra.mxu0 0.0
      %413 = vmatpush.msra.mxu0 0.0
      %414 = vmatpush.msra.mxu0 %v386
      %415 = vmatmul.f32.gmra.mxu0 %v397
      %v416 = vpop.f32.mrf.mxu0
      %v417 = vadd.f32 %v393, %v416
      %418 = vdwg.mxu0
      %419 = vmatpush.msra.mxu0 0.0
      %420 = vmatpush.msra.mxu0 0.0
      %421 = vmatpush.msra.mxu0 0.0
      %422 = vmatpush.msra.mxu0 0.0
      %423 = vmatpush.msra.mxu0 0.0
      %424 = vmatpush.msra.mxu0 0.0
      %425 = vmatpush.msra.mxu0 0.0
      %426 = vmatpush.msra.mxu0 0.0
      %427 = vmatpush.msra.mxu0 0.0
      %428 = vmatpush.msra.mxu0 0.0
      %429 = vmatpush.msra.mxu0 0.0
      %430 = vmatpush.msra.mxu0 0.0
      %431 = vmatpush.msra.mxu0 0.0
      %432 = vmatpush.msra.mxu0 0.0
      %433 = vmatpush.msra.mxu0 0.0
      %434 = vmatpush.msra.mxu0 %v387
      %435 = vmatmul.f32.gmra.mxu0 %v397
      %v436 = vpop.f32.mrf.mxu0
      %v437 = vadd.f32 %v393, %v436
      %438 = vdwg.mxu0
      %v439 = vxor.u32 %v417, 2147483648
      %v440 = vxor.u32 %v437, 2147483648
      %v441 = vmul.f32 %v439, 1.442695
      %v442 = vpow.pop %v441
      %v443 = vmul.f32 %v440, 1.442695
      %v444 = vpow.pop %v443
      %v445 = vadd.f32 %v442, 1.0
      %v446 = vadd.f32 %v444, 1.0
      %v447 = vrcp.pop %v445
      %v448 = vmul.f32 %v445, %v447
      %v449 = vsub.f32 1.0, %v448
      %v450 = vmul.f32 %v447, %v449
      %v451 = vadd.f32 %v447, %v450
      %vm452 = vweird.f32 %v445
      %vm453 = vweird.f32 %v447
      %vm454 = vmor %vm452, %vm453
      %v455 = vsel %vm454, %v447, %v451
      %v456 = vand.u32 2147483647, %v445
      %vm457 = vcmp.eq.f32.partialorder %v456, 8.507059e+37
      %v458 = vand.u32 %v445, 2147483648
      %v459 = vor.u32 1.1754944e-38, %v458
      %v460 = vsel %vm457, %v459, %v455
      %v461 = vmul.f32 1.0, %v460
      %v462 = vrcp.pop %v446
      %v463 = vmul.f32 %v446, %v462
      %v464 = vsub.f32 1.0, %v463
      %v465 = vmul.f32 %v462, %v464
      %v466 = vadd.f32 %v462, %v465
      %vm467 = vweird.f32 %v446
      %vm468 = vweird.f32 %v462
      %vm469 = vmor %vm467, %vm468
      %v470 = vsel %vm469, %v462, %v466
      %v471 = vand.u32 2147483647, %v446
      %vm472 = vcmp.eq.f32.partialorder %v471, 8.507059e+37
      %v473 = vand.u32 %v446, 2147483648
      %v474 = vor.u32 1.1754944e-38, %v473
      %v475 = vsel %vm472, %v474, %v470
      %v476 = vmul.f32 1.0, %v475
      %v479 = vrot.slane %v476, 7
      %vm480 = vcmask 1040384
      %v481 = vsel %vm480, %v461, %v479
      %vm482 = vcmask 1041409
      %v483 = vsel %vm482, %v461, %v479
      %v484 = vrot.slane %v483, 1
      %vm485 = vcmask 1042434
      %v486 = vsel %vm485, %v461, %v479
      %v487 = vrot.slane %v486, 2
      %vm488 = vcmask 1043459
      %v489 = vsel %vm488, %v461, %v479
      %v490 = vrot.slane %v489, 3
      %vm491 = vcmask 1044484
      %v492 = vsel %vm491, %v461, %v479
      %v493 = vrot.slane %v492, 4
      %vm494 = vcmask 1045509
      %v495 = vsel %vm494, %v461, %v479
      %v496 = vrot.slane %v495, 5
      %vm497 = vcmask 1046534
      %v498 = vsel %vm497, %v461, %v479
      %v499 = vrot.slane %v498, 6
      %vm500 = vcmask 1046528
      %v501 = vsel %vm500, %v479, %v461
      %v502 = vrot.slane %v501, 7
      %v503 = vld [vmem:[%s315] sm:$0xff]
      %v504 = vld [vmem:[%s315 + $0x8] sm:$0xff]
      %v505 = vld [vmem:[%s315 + $0x10] sm:$0xff]
      %v506 = vld [vmem:[%s315 + $0x18] sm:$0xff]
      %v507 = vld [vmem:[%s315 + $0x20] sm:$0xff]
      %v508 = vld [vmem:[%s315 + $0x28] sm:$0xff]
      %v509 = vld [vmem:[%s315 + $0x30] sm:$0xff]
      %v510 = vld [vmem:[%s315 + $0x38] sm:$0xff]
      %v511 = vperm.slane %v481, 0
      %v512 = vperm.slane %v481, 1
      %v513 = vperm.slane %v484, 0
      %v514 = vperm.slane %v484, 1
      %v515 = vperm.slane %v487, 0
      %v516 = vperm.slane %v487, 1
      %v517 = vperm.slane %v490, 0
      %v518 = vperm.slane %v490, 1
      %v519 = vperm.slane %v493, 0
      %v520 = vperm.slane %v493, 1
      %v521 = vperm.slane %v496, 0
      %v522 = vperm.slane %v496, 1
      %v523 = vperm.slane %v499, 0
      %v524 = vperm.slane %v499, 1
      %v525 = vperm.slane %v502, 0
      %v526 = vperm.slane %v502, 1
      %551 = vst [vmem:[#allocation1] ss:$2 sm:$0xff] %v503
      %v552 = vld.sshfl [vmem:[#allocation1] sm:$0xff pattern:$0x75316420]
      %v553 = vld.sshfl [vmem:[#allocation1 + $0x8] sm:$0xff pattern:$0x75316420]
      %s554 = scalar_lea.vmem [#allocation1], 16
      %555 = vst [vmem:[%s554] ss:$2 sm:$0xff] %v504
      %v556 = vld.sshfl [vmem:[#allocation1 + $0x10] sm:$0xff pattern:$0x75316420]
      %v557 = vld.sshfl [vmem:[#allocation1 + $0x18] sm:$0xff pattern:$0x75316420]
      %s558 = scalar_lea.vmem [#allocation1], 32
      %559 = vst [vmem:[%s558] ss:$2 sm:$0xff] %v505
      %v560 = vld.sshfl [vmem:[#allocation1 + $0x20] sm:$0xff pattern:$0x75316420]
      %v561 = vld.sshfl [vmem:[#allocation1 + $0x28] sm:$0xff pattern:$0x75316420]
      %s562 = scalar_lea.vmem [#allocation1], 48
      %563 = vst [vmem:[%s562] ss:$2 sm:$0xff] %v506
      %v564 = vld.sshfl [vmem:[#allocation1 + $0x30] sm:$0xff pattern:$0x75316420]
      %v565 = vld.sshfl [vmem:[#allocation1 + $0x38] sm:$0xff pattern:$0x75316420]
      %566 = vst [vmem:[#allocation1] ss:$2 sm:$0xff] %v507
      %v567 = vld.sshfl [vmem:[#allocation1] sm:$0xff pattern:$0x75316420]
      %v568 = vld.sshfl [vmem:[#allocation1 + $0x8] sm:$0xff pattern:$0x75316420]
      %569 = vst [vmem:[%s554] ss:$2 sm:$0xff] %v508
      %v570 = vld.sshfl [vmem:[#allocation1 + $0x10] sm:$0xff pattern:$0x75316420]
      %v571 = vld.sshfl [vmem:[#allocation1 + $0x18] sm:$0xff pattern:$0x75316420]
      %572 = vst [vmem:[%s558] ss:$2 sm:$0xff] %v509
      %v573 = vld.sshfl [vmem:[#allocation1 + $0x20] sm:$0xff pattern:$0x75316420]
      %v574 = vld.sshfl [vmem:[#allocation1 + $0x28] sm:$0xff pattern:$0x75316420]
      %575 = vst [vmem:[%s562] ss:$2 sm:$0xff] %v510
      %v576 = vld.sshfl [vmem:[#allocation1 + $0x30] sm:$0xff pattern:$0x75316420]
      %v577 = vld.sshfl [vmem:[#allocation1 + $0x38] sm:$0xff pattern:$0x75316420]
      %v594 = vmul.f32 %v511, %v552
      %v595 = vmul.f32 %v512, %v553
      %v596 = vmul.f32 %v513, %v556
      %v597 = vmul.f32 %v514, %v557
      %v598 = vmul.f32 %v515, %v560
      %v599 = vmul.f32 %v516, %v561
      %v600 = vmul.f32 %v517, %v564
      %v601 = vmul.f32 %v518, %v565
      %v602 = vmul.f32 %v519, %v567
      %v603 = vmul.f32 %v520, %v568
      %v604 = vmul.f32 %v521, %v570
      %v605 = vmul.f32 %v522, %v571
      %v606 = vmul.f32 %v523, %v573
      %v607 = vmul.f32 %v524, %v574
      %v608 = vmul.f32 %v525, %v576
      %v609 = vmul.f32 %v526, %v577
      %v626 = vrot.slane %v595, 4
      %v627 = vrot.slane %v597, 4
      %v628 = vrot.slane %v599, 4
      %v629 = vrot.slane %v601, 4
      %v630 = vrot.slane %v603, 4
      %v631 = vrot.slane %v605, 4
      %v632 = vrot.slane %v607, 4
      %v633 = vrot.slane %v609, 4
      %vm634 = vcmask 1043456
      %v635 = vsel %vm634, %v594, %v626
      %v636 = vsel %vm634, %v596, %v627
      %v637 = vsel %vm634, %v598, %v628
      %v638 = vsel %vm634, %v600, %v629
      %v639 = vsel %vm634, %v602, %v630
      %v640 = vsel %vm634, %v604, %v631
      %v641 = vsel %vm634, %v606, %v632
      %v642 = vsel %vm634, %v608, %v633
      %651 = vst [vmem:[%s325] sm:$0xff] %v635
      %652 = vst [vmem:[%s325 + $0x8] sm:$0xff] %v636
      %653 = vst [vmem:[%s325 + $0x10] sm:$0xff] %v637
      %654 = vst [vmem:[%s325 + $0x18] sm:$0xff] %v638
      %655 = vst [vmem:[%s325 + $0x20] sm:$0xff] %v639
      %656 = vst [vmem:[%s325 + $0x28] sm:$0xff] %v640
      %657 = vst [vmem:[%s325 + $0x30] sm:$0xff] %v641
      %658 = vst [vmem:[%s325 + $0x38] sm:$0xff] %v642
      %s659 = smul.u32 2, %s22
      %p660 = scmp.lt.s32.totalorder %s21, 1
      %s661 = scalar_select %p660, %s21, 1
      %p662 = scmp.lt.s32.totalorder %s659, 1
      %s663 = scalar_select %p662, %s659, 1
      %s664 = smul.addr %s661, 16
      %s665 = sadd.s32 %s663, %s664
      %s666 = smul.addr %s665, 4
      %s667 = scalar_lea.vmem %s6, %s666
      // Predicated region
      $region45: #{feature_att.1} parent=43 // pred_check
        %p668 = pneg %p189
      $region46: #{feature_att.1} parent=43 // pred_check_branch
        %670 = sbr.rel (%p668) target = $region48
      $region47: #{feature_att.1} parent=43 // pred_region
        %s671 = smul.u32 2, %s22
      $region48: #{feature_att.1} parent=43 // pred_fallthru
        _
    $region44: #{feature_att.1} parent=5 // pred_fallthru
      _
    %p672 = scmp.le.s32.totalorder 2, %s12
    // Predicated region
    $region49: #{feature_att.1} parent=5 // pred_check
      %p673 = pneg %p672
    $region50: #{feature_att.1} parent=5 // pred_check_branch
      %675 = sbr.rel (%p673) target = $region52
    $region51: #{feature_att.1} parent=5 // pred_region
      %s676 = ssub.s32 %s12, 2
      // Predicated region
      $region53: #{feature_att.1} parent=51 // pred_check
        %p677 = pneg %p195
      $region54: #{feature_att.1} parent=51 // pred_check_branch
        %679 = sbr.rel (%p677) target = $region56
      $region55: #{feature_att.1} parent=51 // pred_region
        %s680 = smul.u32 2, %s24
        %p681 = scmp.lt.s32.totalorder %s23, 1
        %s682 = scalar_select %p681, %s23, 1
        %p683 = scmp.lt.s32.totalorder %s680, 1
        %s684 = scalar_select %p683, %s680, 1
        %s685 = smul.addr %s682, 16
        %s686 = sadd.s32 %s684, %s685
        %s687 = smul.addr %s686, 4
        %s688 = scalar_lea.vmem %s6, %s687
      $region56: #{feature_att.1} parent=51 // pred_fallthru
        _
    $region52: #{feature_att.1} parent=5 // pred_fallthru
      _
  $region6: #{feature_att.1} parent=0 // loop_footer
    %s16 = sadd.s32 1, %s12
  $region7: #{feature_att.1} parent=0 // loop_footer_branch
    %11 = sbr.rel target = $region3
  $region8: #{feature_att.1} parent=0 // loop_exit
    _

</llo_original>
